<compile_context>
chip_gen: v6e
topology: v6e:2x2x1
jax: 0.10.0
libtpu: 0.0.40
codegen_flags: <defaults>
</compile_context>

<pallas_src>
import jax
import jax.numpy as jnp
from jax.experimental import pallas as pl
from jax.experimental.pallas import tpu as pltpu  # noqa: F401  (TPU backend)


def _passthrough_kernel(*refs):
    # Every output is aliased to its corresponding input (input_output_aliases),
    # so the correct bits are already resident in the output buffers.  No loads,
    # no stores, no DMAs: zero in-kernel data movement is the roofline for an
    # identity op on all of v5e / v6e / v7x.
    del refs


def place_holder_forward(graph):
    """PlaceHolder.forward(graph) -> graph, bit-exact, via one Pallas call.

    All array leaves of the graph pytree are routed through a SINGLE
    pallas_call; each leaf is kept in HBM (memory_space=pl.ANY) and aliased
    input->output, so the kernel itself performs no data movement.  Non-array
    leaves (if any) are passed through unchanged.

    For callers that jit the surrounding program: donate the graph arrays
    (jax.jit(..., donate_argnums=...)) and the whole PlaceHolder compiles to
    zero HBM traffic.
    """
    leaves, treedef = jax.tree_util.tree_flatten(graph)
    arr_idx = [i for i, leaf in enumerate(leaves)
               if hasattr(leaf, "shape") and hasattr(leaf, "dtype")]
    if not arr_idx:
        return graph  # nothing array-valued to route through the TPU

    arrs = [leaves[i] for i in arr_idx]
    n = len(arrs)
    any_spec = pl.BlockSpec(memory_space=pl.ANY)

    outs = pl.pallas_call(
        _passthrough_kernel,
        out_shape=tuple(jax.ShapeDtypeStruct(a.shape, a.dtype) for a in arrs),
        in_specs=[any_spec] * n,
        out_specs=tuple(any_spec for _ in range(n)),
        input_output_aliases={i: i for i in range(n)},
    )(*arrs)

    new_leaves = list(leaves)
    for i, o in zip(arr_idx, outs):
        new_leaves[i] = o
    return jax.tree_util.tree_unflatten(treedef, new_leaves)


if __name__ == "__main__":
    key = jax.random.PRNGKey(0)
    k = jax.random.split(key, 8)

    # Small dual-graph input consistent with the adaptive_ori_dual_layer
    # pipeline: a (fplanGraph, venoGraph) tuple of dict "graphs".
    N_V, E_V = 16, 32     # veno graph: nodes / edges
    N_F, E_F = 24, 40     # fplan graph: nodes / edges
    D = 128               # feature dim

    veno = {
        "x": jax.random.normal(k[0], (N_V, D), jnp.float32),
        "edge_index": jax.random.randint(k[1], (2, E_V), 0, N_V),
        "edge_attr": jax.random.normal(k[2], (E_V, D), jnp.float32),
        "edge_dual_idx": jax.random.randint(k[3], (E_V, 1), 0, E_F),
    }
    fplan = {
        "x": jax.random.normal(k[4], (N_F, D), jnp.float32),
        "edge_index": jax.random.randint(k[5], (2, E_F), 0, N_F),
        "edge_attr": jax.random.normal(k[6], (E_F, D), jnp.float32),
        "edge_dual_idx": jax.random.randint(k[7], (E_F, 1), 0, E_V + 1),
    }

    graph_in = (fplan, veno)
    graph_out = place_holder_forward(graph_in)
    jax.block_until_ready(graph_out)

    # PlaceHolder.forward is the identity: outputs must equal inputs exactly.
    in_leaves, in_def = jax.tree_util.tree_flatten(graph_in)
    out_leaves, out_def = jax.tree_util.tree_flatten(graph_out)
    assert in_def == out_def
    assert len(in_leaves) == len(out_leaves)
    for a, b in zip(in_leaves, out_leaves):
        assert a.shape == b.shape and a.dtype == b.dtype
        assert bool(jnp.all(a == b)), "PlaceHolder pass-through mismatch"

    print("KERNEL_OK")
</pallas_src>

<mosaic_0001>
module attributes {stable_mosaic.version = 11 : i64} {
  func.func @_passthrough_kernel(%arg0: memref<40x128xf32, #tpu.memory_space<any>>, %arg1: memref<40x1xi32, #tpu.memory_space<any>>, %arg2: memref<2x40xi32, #tpu.memory_space<any>>, %arg3: memref<24x128xf32, #tpu.memory_space<any>>, %arg4: memref<32x128xf32, #tpu.memory_space<any>>, %arg5: memref<32x1xi32, #tpu.memory_space<any>>, %arg6: memref<2x32xi32, #tpu.memory_space<any>>, %arg7: memref<16x128xf32, #tpu.memory_space<any>>, %arg8: memref<40x128xf32, #tpu.memory_space<any>>, %arg9: memref<40x1xi32, #tpu.memory_space<any>>, %arg10: memref<2x40xi32, #tpu.memory_space<any>>, %arg11: memref<24x128xf32, #tpu.memory_space<any>>, %arg12: memref<32x128xf32, #tpu.memory_space<any>>, %arg13: memref<32x1xi32, #tpu.memory_space<any>>, %arg14: memref<2x32xi32, #tpu.memory_space<any>>, %arg15: memref<16x128xf32, #tpu.memory_space<any>>) attributes {dimension_semantics = [], scalar_prefetch = 0 : i64, scratch_operands = 0 : i64, tpu.core_type = #tpu.core_type<tc>} {
    return
  }
}

</mosaic_0001>

<llo_original>
// kernel: tpu_custom_call.1
$region0: #{tpu_custom_call.1}
  #allocation0 [shape = 'u32[]', space=smem, size = 0x4, offset = 0x4, fixed_abs, tag = 'smem constant byte address 0x4 - core index']
  #allocation1 [shape = 'u32[144,128]{1,0:T(1,128)}', space=vmem, size = 0x12000, scoped, tag = 'internal scratch']
  %s0 = inlined_call_operand.vmem [shape: f32[40,128], index: 0, kind: input, shape index: {}, may-alias: {0,8}]
  %s1 = inlined_call_operand.vmem [shape: s32[40,1], index: 1, kind: input, shape index: {}, may-alias: {1,9}]
  %s2 = inlined_call_operand.vmem [shape: s32[2,40], index: 2, kind: input, shape index: {}, may-alias: {2,10}]
  %s3 = inlined_call_operand.vmem [shape: f32[24,128], index: 3, kind: input, shape index: {}, may-alias: {3,11}]
  %s4 = inlined_call_operand.vmem [shape: f32[32,128], index: 4, kind: input, shape index: {}, may-alias: {4,12}]
  %s5 = inlined_call_operand.vmem [shape: s32[32,1], index: 5, kind: input, shape index: {}, may-alias: {5,13}]
  %s6 = inlined_call_operand.vmem [shape: s32[2,32], index: 6, kind: input, shape index: {}, may-alias: {6,14}]
  %s7 = inlined_call_operand.vmem [shape: f32[16,128], index: 7, kind: input, shape index: {}, may-alias: {7,15}]
  %s8 = inlined_call_operand.vmem [shape: f32[40,128], index: 8, kind: output, shape index: {0}, may-alias: {0,8}]
  %s9 = inlined_call_operand.vmem [shape: s32[40,1], index: 9, kind: output, shape index: {1}, may-alias: {1,9}]
  %s10 = inlined_call_operand.vmem [shape: s32[2,40], index: 10, kind: output, shape index: {2}, may-alias: {2,10}]
  %s11 = inlined_call_operand.vmem [shape: f32[24,128], index: 11, kind: output, shape index: {3}, may-alias: {3,11}]
  %s12 = inlined_call_operand.vmem [shape: f32[32,128], index: 12, kind: output, shape index: {4}, may-alias: {4,12}]
  %s13 = inlined_call_operand.vmem [shape: s32[32,1], index: 13, kind: output, shape index: {5}, may-alias: {5,13}]
  %s14 = inlined_call_operand.vmem [shape: s32[2,32], index: 14, kind: output, shape index: {6}, may-alias: {6,14}]
  %s15 = inlined_call_operand.vmem [shape: f32[16,128], index: 15, kind: output, shape index: {7}, may-alias: {7,15}]
  %16 = xla_tuple %s8, %s9, %s10, %s11, %s12, %s13, %s14, %s15
  %s17 = sld [smem:[#allocation0]]
  $region2: #{tpu_custom_call.1} parent=0
    _
  %s19 = ssub.s32 1, %s17
  %s20 = scalar_select 0, %s19, %s17

</llo_original>
